<compile_context>
chip_gen: v5e
topology: v5e:2x2
jax: 0.10.0
libtpu: 0.0.40
codegen_flags: <defaults>
</compile_context>

<pallas_src>
import functools

import jax
import jax.numpy as jnp
from jax.experimental import pallas as pl
from jax.experimental.pallas import tpu as pltpu


def _round_up(a, b):
    return ((a + b - 1) // b) * b


def _apply_activation(y, activation):
    if activation is None:
        return y
    act = activation.lower()
    if act == "relu":
        return jnp.maximum(y, 0.0)
    if act == "tanh":
        return jnp.tanh(y)
    if act == "sigmoid":
        return jax.nn.sigmoid(y)
    if act == "gelu":
        return jax.nn.gelu(y)
    # TODO(synk): other nn.* activations constructed via eval() are not mapped here.
    raise ValueError(f"unsupported activation: {activation}")


def fc_kernel(seed_ref, x_ref, w_ref, b_ref, o_ref, acc_ref, *,
              activation, dropout_rate, training):
    k = pl.program_id(2)
    num_k = pl.num_programs(2)

    @pl.when(k == 0)
    def _():
        acc_ref[...] = jnp.zeros_like(acc_ref)

    x = x_ref[...]  # native dtype, feeds the MXU directly

    if training and dropout_rate > 0.0:
        # Inverted dropout; seed depends only on (i, k) so the mask for this x
        # tile is identical across all output (j) tiles.
        pltpu.prng_seed(seed_ref[0] + pl.program_id(0) * num_k + k)
        bits = pltpu.bitcast(pltpu.prng_random_bits(x.shape), jnp.uint32)
        threshold = jnp.uint32(min(int(dropout_rate * (1 << 32)), (1 << 32) - 1))
        keep = bits >= threshold
        scale = jnp.asarray(1.0 / (1.0 - dropout_rate), dtype=x.dtype)
        x = jnp.where(keep, x * scale, jnp.zeros_like(x))

    acc_ref[...] += jnp.dot(x, w_ref[...], preferred_element_type=jnp.float32)

    @pl.when(k == num_k - 1)
    def _():
        y = acc_ref[...] + b_ref[...].astype(jnp.float32)
        y = _apply_activation(y, activation)
        o_ref[...] = y.astype(o_ref.dtype)


def fc_layer(x, weight, bias, *, activation=None, dropout_rate=0.0,
             training=False, seed=0, tm=512, tn=512, tk=2048):
    """Pallas FCLayer forward.

    x:      (B, input_dim)
    weight: (output_dim, input_dim)   -- PyTorch nn.Linear layout
    bias:   (output_dim,)
    """
    B, d_in = x.shape
    d_out, d_in_w = weight.shape
    assert d_in == d_in_w
    assert bias.shape == (d_out,)

    # --- tile sizes clamped to the (padded) problem -------------------------
    tm_eff = min(tm, _round_up(B, 8))          # sublane-aligned batch tile
    tn_eff = min(tn, _round_up(d_out, 128))    # lane-dense output tile
    tk_eff = min(tk, _round_up(d_in, 128))     # lane-dense x / sublane-aligned W tile

    B_pad = _round_up(B, tm_eff)
    N_pad = _round_up(d_out, tn_eff)
    K_pad = _round_up(d_in, tk_eff)

    # --- zero-pad operands (exact math, lane-dense layout) ------------------
    x_p = jnp.pad(x, ((0, B_pad - B), (0, K_pad - d_in)))
    w_t = jnp.pad(weight.T, ((0, K_pad - d_in), (0, N_pad - d_out)))  # (K_pad, N_pad)
    b_p = jnp.pad(bias, (0, N_pad - d_out)).reshape(1, N_pad)
    seed_arr = jnp.array([seed], dtype=jnp.int32)

    grid = (B_pad // tm_eff, N_pad // tn_eff, K_pad // tk_eff)

    # --- explicit VMEM budget (double-buffered inputs/outputs + f32 acc) ----
    itemsize_x = jnp.dtype(x.dtype).itemsize
    itemsize_w = jnp.dtype(weight.dtype).itemsize
    vmem_bytes = (2 * tm_eff * tk_eff * itemsize_x +
                  2 * tk_eff * tn_eff * itemsize_w +
                  2 * tn_eff * jnp.dtype(bias.dtype).itemsize +
                  2 * tm_eff * tn_eff * itemsize_x +
                  tm_eff * tn_eff * 4)
    vmem_limit = min(max(int(vmem_bytes * 1.5) + (4 << 20), 32 << 20), 64 << 20)

    kernel = functools.partial(fc_kernel, activation=activation,
                               dropout_rate=float(dropout_rate),
                               training=training)

    out_padded = pl.pallas_call(
        kernel,
        out_shape=jax.ShapeDtypeStruct((B_pad, N_pad), x.dtype),
        grid_spec=pltpu.PrefetchScalarGridSpec(
            num_scalar_prefetch=1,
            grid=grid,
            in_specs=[
                pl.BlockSpec((tm_eff, tk_eff), lambda i, j, k, seed: (i, k)),
                pl.BlockSpec((tk_eff, tn_eff), lambda i, j, k, seed: (k, j)),
                pl.BlockSpec((1, tn_eff), lambda i, j, k, seed: (0, j)),
            ],
            out_specs=pl.BlockSpec((tm_eff, tn_eff), lambda i, j, k, seed: (i, j)),
            scratch_shapes=[pltpu.VMEM((tm_eff, tn_eff), jnp.float32)],
        ),
        compiler_params=pltpu.CompilerParams(
            dimension_semantics=("parallel", "parallel", "arbitrary"),
            vmem_limit_bytes=vmem_limit),
    )(seed_arr, x_p, w_t, b_p)

    return out_padded[:B, :d_out]


if __name__ == "__main__":
    key = jax.random.PRNGKey(0)
    kx, kw, kb = jax.random.split(key, 3)

    batch, input_dim, output_dim = 8, 32, 16

    x = jax.random.normal(kx, (batch, input_dim), dtype=jnp.float32)
    # Deterministic init mimicking nn.Linear (uniform in +/- 1/sqrt(fan_in)).
    bound = 1.0 / (input_dim ** 0.5)
    weight = jax.random.uniform(kw, (output_dim, input_dim), jnp.float32,
                                minval=-bound, maxval=bound)
    bias = jax.random.uniform(kb, (output_dim,), jnp.float32,
                              minval=-bound, maxval=bound)

    # FCLayer(input_dim, output_dim, dropout_rate=0.0, activation="Tanh"),
    # eval-mode forward (dropout is identity).
    out = fc_layer(x, weight, bias, activation="Tanh",
                   dropout_rate=0.0, training=False)
    out = jax.block_until_ready(out)

    # Reference check in plain JAX.
    ref = jnp.tanh(x @ weight.T + bias)
    assert out.shape == (batch, output_dim)
    assert jnp.allclose(out, ref, atol=1e-5, rtol=1e-5)

    # Also exercise the no-activation path.
    out2 = jax.block_until_ready(
        fc_layer(x, weight, bias, activation=None, dropout_rate=0.0, training=False))
    ref2 = x @ weight.T + bias
    assert jnp.allclose(out2, ref2, atol=1e-5, rtol=1e-5)

    print("KERNEL_OK")
</pallas_src>

<mosaic_0001>
module attributes {stable_mosaic.version = 11 : i64} {
  func.func @fc_kernel(%arg0: i32, %arg1: i32, %arg2: i32, %arg3: memref<1xi32, #tpu.memory_space<smem>>, %arg4: memref<8x128xf32, #tpu.memory_space<vmem>>, %arg5: memref<128x128xf32, #tpu.memory_space<vmem>>, %arg6: memref<1x128xf32, #tpu.memory_space<vmem>>, %arg7: memref<8x128xf32, #tpu.memory_space<vmem>>, %arg8: memref<8x128xf32, #tpu.memory_space<vmem>>) attributes {dimension_semantics = [#tpu.dimension_semantics<parallel>, #tpu.dimension_semantics<parallel>, #tpu.dimension_semantics<arbitrary>], iteration_bounds = array<i64: 1, 1, 1>, scalar_prefetch = 1 : i64, scratch_operands = 1 : i64, tpu.core_type = #tpu.core_type<tc>, window_params = [{transform_indices = @transform_0, window_bounds = array<i64: 8, 128>}, {transform_indices = @transform_1, window_bounds = array<i64: 128, 128>}, {transform_indices = @transform_2, window_bounds = array<i64: 1, 128>}, {transform_indices = @transform_3, window_bounds = array<i64: 8, 128>}]} {
    %c0_i32 = arith.constant 0 : i32
    %0 = arith.cmpi eq, %arg2, %c0_i32 : i32
    %1 = arith.extui %0 : i1 to i32
    %c0_i32_0 = arith.constant 0 : i32
    %2 = arith.cmpi ne, %1, %c0_i32_0 : i32
    scf.if %2 {
      %cst_10 = arith.constant 0.000000e+00 : f32
      %12 = vector.broadcast %cst_10 : f32 to vector<8x128xf32>
      %c0_11 = arith.constant 0 : index
      %c0_12 = arith.constant 0 : index
      %13 = vector.load %arg8[%c0_11, %c0_12] : memref<8x128xf32, #tpu.memory_space<vmem>>, vector<8x128xf32>
      tpu.vector_store %arg8[%c0_11, %c0_12], %12 {strides = array<i32>} : memref<8x128xf32, #tpu.memory_space<vmem>>, vector<8x128xf32>,
    } else {
    }
    %c0 = arith.constant 0 : index
    %c0_1 = arith.constant 0 : index
    %3 = vector.load %arg4[%c0, %c0_1] : memref<8x128xf32, #tpu.memory_space<vmem>>, vector<8x128xf32>
    %c0_2 = arith.constant 0 : index
    %c0_3 = arith.constant 0 : index
    %4 = vector.load %arg8[%c0_2, %c0_3] : memref<8x128xf32, #tpu.memory_space<vmem>>, vector<8x128xf32>
    %c0_4 = arith.constant 0 : index
    %c0_5 = arith.constant 0 : index
    %5 = vector.load %arg5[%c0_4, %c0_5] : memref<128x128xf32, #tpu.memory_space<vmem>>, vector<128x128xf32>
    %cst = arith.constant dense<0.000000e+00> : vector<8x128xf32>
    %6 = tpu.matmul %3, %5, %cst {dimension_numbers = #tpu.dot_dimension_numbers<[1], [0], [0], [1], [0, 0, 1, 1], [], []>} : vector<8x128xf32>, vector<128x128xf32>, vector<8x128xf32> -> vector<8x128xf32>
    %7 = arith.addf %4, %6 : vector<8x128xf32>
    %c0_6 = arith.constant 0 : index
    %c0_7 = arith.constant 0 : index
    %8 = vector.load %arg8[%c0_6, %c0_7] : memref<8x128xf32, #tpu.memory_space<vmem>>, vector<8x128xf32>
    tpu.vector_store %arg8[%c0_6, %c0_7], %7 {strides = array<i32>} : memref<8x128xf32, #tpu.memory_space<vmem>>, vector<8x128xf32>,
    %c0_i32_8 = arith.constant 0 : i32
    %9 = arith.cmpi eq, %arg2, %c0_i32_8 : i32
    %10 = arith.extui %9 : i1 to i32
    %c0_i32_9 = arith.constant 0 : i32
    %11 = arith.cmpi ne, %10, %c0_i32_9 : i32
    scf.if %11 {
      %c0_10 = arith.constant 0 : index
      %c0_11 = arith.constant 0 : index
      %12 = vector.load %arg8[%c0_10, %c0_11] : memref<8x128xf32, #tpu.memory_space<vmem>>, vector<8x128xf32>
      %c0_12 = arith.constant 0 : index
      %c0_13 = arith.constant 0 : index
      %13 = vector.load %arg6[%c0_12, %c0_13] : memref<1x128xf32, #tpu.memory_space<vmem>>, vector<1x128xf32>
      %14 = vector.broadcast %13 : vector<1x128xf32> to vector<8x128xf32>
      %15 = arith.addf %12, %14 : vector<8x128xf32>
      %16 = math.tanh %15 : vector<8x128xf32>
      %c0_14 = arith.constant 0 : index
      %c0_15 = arith.constant 0 : index
      %17 = vector.load %arg7[%c0_14, %c0_15] : memref<8x128xf32, #tpu.memory_space<vmem>>, vector<8x128xf32>
      tpu.vector_store %arg7[%c0_14, %c0_15], %16 {strides = array<i32>} : memref<8x128xf32, #tpu.memory_space<vmem>>, vector<8x128xf32>,
    } else {
    }
    return
  }
  func.func @transform_0(%arg0: i32, %arg1: i32, %arg2: i32, %arg3: memref<1xi32, #tpu.memory_space<smem>>) -> (i32, i32) {
    %c0_i32 = arith.constant 0 : i32
    return %arg0, %arg2 : i32, i32
  }
  func.func @transform_1(%arg0: i32, %arg1: i32, %arg2: i32, %arg3: memref<1xi32, #tpu.memory_space<smem>>) -> (i32, i32) {
    %c0_i32 = arith.constant 0 : i32
    return %arg2, %arg1 : i32, i32
  }
  func.func @transform_2(%arg0: i32, %arg1: i32, %arg2: i32, %arg3: memref<1xi32, #tpu.memory_space<smem>>) -> (i32, i32) {
    %c0_i32 = arith.constant 0 : i32
    %c0_i32_0 = arith.constant 0 : i32
    return %c0_i32, %arg1 : i32, i32
  }
  func.func @transform_3(%arg0: i32, %arg1: i32, %arg2: i32, %arg3: memref<1xi32, #tpu.memory_space<smem>>) -> (i32, i32) {
    %c0_i32 = arith.constant 0 : i32
    return %arg0, %arg1 : i32, i32
  }
}

</mosaic_0001>

<llo_original>
// kernel: tpu_custom_call.1
$region0: #{tpu_custom_call.1}
  #allocation0 [shape = 'u32[]', space=smem, size = 0x4, offset = 0x4, fixed_abs, tag = 'smem constant byte address 0x4 - core index']
  #allocation1 [shape = 'u32[72,128]{1,0:T(1,128)}', space=vmem, size = 0x9000, scoped, tag = 'internal scratch']
  #allocation2 [shape = 'f32[8,128]{1,0:T(8,128)}', space=vmem, size = 0x1000, scoped, tag = 'scratch operand']
  #allocation3 [shape = 's32[1]{0}', space=sflag, size = 0x4, scoped, tag = 'scoped memory for tpu_custom_call.1']
  #allocation4 [shape = 's32[1]{0:T(128)S(6)}', space=smem, size = 0x200, scoped, tag = 'prefetched SMEM operand 0']
  %s0 = inlined_call_operand.<no memory space> [shape: s32[1], index: 0, kind: input, shape index: {}]
  %s1 = inlined_call_operand.hbm [shape: f32[8,128], index: 1, kind: input, shape index: {}]
  %s2 = inlined_call_operand.hbm [shape: f32[128,128], index: 2, kind: input, shape index: {}]
  %s3 = inlined_call_operand.vmem [shape: f32[1,128], index: 3, kind: input, shape index: {}]
  %s4 = inlined_call_operand.hbm [shape: f32[8,128], index: 4, kind: output, shape index: {}]
  %s5 = sld [smem:[#allocation0]]
  $region38: #{tpu_custom_call.1} parent=0
    _
  %s7 = ssub.s32 1, %s5
  %s8 = scalar_select 0, %s7, %s5
  %9 = sst [smem:[#allocation4]] %s0
  $region1: #{tpu_custom_call.1} parent=0
    #allocation5 [shape = 'u8[4096]{0}', space=vmem, size = 0x1000, scoped, tag = 'input window, operand 1, single buffered']
    #allocation6 [shape = 's32[1]{0}', space=sflag, size = 0x4, scoped, tag = 'scoped memory for tpu_custom_call.1']
    #allocation7 [shape = 's32[1]{0}', space=sflag, size = 0x4, scoped, tag = 'scoped memory for tpu_custom_call.1']
    #allocation8 [shape = 'u8[65536]{0}', space=vmem, size = 0x10000, scoped, tag = 'input window, operand 2, single buffered']
    #allocation9 [shape = 's32[1]{0}', space=sflag, size = 0x4, scoped, tag = 'scoped memory for tpu_custom_call.1']
    #allocation10 [shape = 'u8[4096]{0}', space=vmem, size = 0x1000, scoped, tag = 'output window, operand 0, single buffered']
    %10 = vsyncpa [#allocation6], 0
    %11 = vsyncpa [#allocation9], 0
    %12 = vsyncpa [#allocation7], 0
    // Predicated region
    $region2: #{tpu_custom_call.1} parent=1 // pred_check
      _
    $region3: #{tpu_custom_call.1} parent=1 // pred_check_branch
      %14 = sbr.rel (0) target = $region5
    $region4: #{tpu_custom_call.1} parent=1 // pred_region
      %16 = vsyncadd [#allocation6], 0
      %s18 = sshll.u32 %s1, 4
      %s19 = int_to_ptr.hbm [resolvable:$true] %s18
      %s20 = sshll.u32 [#allocation5], 4
      %s21 = int_to_ptr.vmem [resolvable:$true] %s20
      %23 = dma.hbm_to_vmem [thread:$0]  %s19, 128, %s21, [#allocation6]
    $region5: #{tpu_custom_call.1} parent=1 // pred_fallthru
      _
    // Predicated region
    $region6: #{tpu_custom_call.1} parent=1 // pred_check
      _
    $region7: #{tpu_custom_call.1} parent=1 // pred_check_branch
      %25 = sbr.rel (0) target = $region9
    $region8: #{tpu_custom_call.1} parent=1 // pred_region
      %27 = vsyncadd [#allocation9], 0
      %s28 = sshll.u32 %s2, 4
      %s29 = int_to_ptr.hbm [resolvable:$true] %s28
      %s30 = sshll.u32 [#allocation8], 4
      %s31 = int_to_ptr.vmem [resolvable:$true] %s30
      %36 = dma.hbm_to_vmem [thread:$0]  %s29, 2048, %s31, [#allocation9], 128, 128, 8
    $region9: #{tpu_custom_call.1} parent=1 // pred_fallthru
      _
    // Predicated region
    $region10: #{tpu_custom_call.1} parent=1 // pred_check
      _
    $region11: #{tpu_custom_call.1} parent=1 // pred_check_branch
      %38 = sbr.rel (0) target = $region13
    $region12: #{tpu_custom_call.1} parent=1 // pred_region
      _
    $region13: #{tpu_custom_call.1} parent=1 // pred_fallthru
      _
    // Predicated region
    $region14: #{tpu_custom_call.1} parent=1 // pred_check
      _
    $region15: #{tpu_custom_call.1} parent=1 // pred_check_branch
      %40 = sbr.rel (0) target = $region17
    $region16: #{tpu_custom_call.1} parent=1 // pred_region
      %42 = dma.done [#allocation6], 128
    $region17: #{tpu_custom_call.1} parent=1 // pred_fallthru
      _
    // Predicated region
    $region18: #{tpu_custom_call.1} parent=1 // pred_check
      _
    $region19: #{tpu_custom_call.1} parent=1 // pred_check_branch
      %44 = sbr.rel (0) target = $region21
    $region20: #{tpu_custom_call.1} parent=1 // pred_region
      %46 = dma.done [#allocation9], 2048
    $region21: #{tpu_custom_call.1} parent=1 // pred_fallthru
      _
    %p47 = scmp.eq.s32.totalorder 0, 0
    // Predicated region
    $region22: #{tpu_custom_call.1} parent=1 // pred_check
      %p48 = pneg %p47
    $region23: #{tpu_custom_call.1} parent=1 // pred_check_branch
      %50 = sbr.rel (%p48) target = $region25
    $region24: #{tpu_custom_call.1} parent=1 // pred_region
      %51 = vst [vmem:[#allocation2] sm:$0xff] 0.0
    $region25: #{tpu_custom_call.1} parent=1 // pred_fallthru
      _
    %v52 = vld [vmem:[#allocation5] sm:$0xff]
    %v53 = vld [vmem:[#allocation2] sm:$0xff]
    %v54 = vld [vmem:[#allocation8] sm:$0xff]
    %v55 = vld [vmem:[#allocation8 + $0x8] sm:$0xff]
    %v56 = vld [vmem:[#allocation8 + $0x10] sm:$0xff]
    %v57 = vld [vmem:[#allocation8 + $0x18] sm:$0xff]
    %v58 = vld [vmem:[#allocation8 + $0x20] sm:$0xff]
    %v59 = vld [vmem:[#allocation8 + $0x28] sm:$0xff]
    %v60 = vld [vmem:[#allocation8 + $0x30] sm:$0xff]
    %v61 = vld [vmem:[#allocation8 + $0x38] sm:$0xff]
    %v62 = vld [vmem:[#allocation8 + $0x40] sm:$0xff]
    %v63 = vld [vmem:[#allocation8 + $0x48] sm:$0xff]
    %v64 = vld [vmem:[#allocation8 + $0x50] sm:$0xff]
    %v65 = vld [vmem:[#allocation8 + $0x58] sm:$0xff]
    %v66 = vld [vmem:[#allocation8 + $0x60] sm:$0xff]
    %v67 = vld [vmem:[#allocation8 + $0x68] sm:$0xff]
    %v68 = vld [vmem:[#allocation8 + $0x70] sm:$0xff]
    %v69 = vld [vmem:[#allocation8 + $0x78] sm:$0xff]
    %70 = vmatpush.msra.mxu0 %v69
    %71 = vmatpush.msra.mxu0 %v68
    %72 = vmatpush.msra.mxu0 %v67
    %73 = vmatpush.msra.mxu0 %v66
    %74 = vmatpush.msra.mxu0 %v65
    %75 = vmatpush.msra.mxu0 %v64
    %76 = vmatpush.msra.mxu0 %v63
    %77 = vmatpush.msra.mxu0 %v62
    %78 = vmatpush.msra.mxu0 %v61
    %79 = vmatpush.msra.mxu0 %v60
    %80 = vmatpush.msra.mxu0 %v59
    %81 = vmatpush.msra.mxu0 %v58
    %82 = vmatpush.msra.mxu0 %v57
    %83 = vmatpush.msra.mxu0 %v56
    %84 = vmatpush.msra.mxu0 %v55
    %85 = vmatpush.msra.mxu0 %v54
    %86 = vmatmul.f32.gmra.mxu0 %v52
    %v87 = vpop.f32.mrf.mxu0
    %v88 = vadd.f32 0.0, %v87
    %89 = vdwg.mxu0
    %v90 = vadd.f32 %v53, %v88
    %91 = vst [vmem:[#allocation2] sm:$0xff] %v90
    // Predicated region
    $region26: #{tpu_custom_call.1} parent=1 // pred_check
      %p92 = pneg %p47
    $region27: #{tpu_custom_call.1} parent=1 // pred_check_branch
      %94 = sbr.rel (%p92) target = $region29
    $region28: #{tpu_custom_call.1} parent=1 // pred_region
      %v95 = vld [vmem:[#allocation2] sm:$0xff]
      %v96 = vld [vmem:[%s3] sm:$0x1]
      %v98 = vperm.slane %v96, 0
      %v100 = vadd.f32 %v95, %v98
      %v101 = vtanh.pop %v100
      %102 = vst [vmem:[#allocation10] sm:$0xff] %v101
    $region29: #{tpu_custom_call.1} parent=1 // pred_fallthru
      _
    // Predicated region
    $region30: #{tpu_custom_call.1} parent=1 // pred_check
      _
    $region31: #{tpu_custom_call.1} parent=1 // pred_check_branch
      %104 = sbr.rel (0) target = $region33
    $region32: #{tpu_custom_call.1} parent=1 // pred_region
      %106 = vsyncadd [#allocation7], 0
      %s108 = sshll.u32 [#allocation10], 4
      %s109 = int_to_ptr.vmem [resolvable:$true] %s108
      %s110 = sshll.u32 %s4, 4
      %s111 = int_to_ptr.hbm [resolvable:$true] %s110
      %113 = dma.vmem_to_hbm [thread:$0]  %s109, 128, %s111, [#allocation7]
    $region33: #{tpu_custom_call.1} parent=1 // pred_fallthru
      _
    // Predicated region
    $region34: #{tpu_custom_call.1} parent=1 // pred_check
      _
    $region35: #{tpu_custom_call.1} parent=1 // pred_check_branch
      %115 = sbr.rel (0) target = $region37
    $region36: #{tpu_custom_call.1} parent=1 // pred_region
      %117 = dma.done [#allocation7], 128
    $region37: #{tpu_custom_call.1} parent=1 // pred_fallthru
      _
    %118 = vsyncpa [#allocation6], 1
    %119 = vsyncpa [#allocation9], 1
    %120 = vsyncpa [#allocation7], 1

</llo_original>
